<compile_context>
chip_gen: v5e
topology: v5e:2x2
jax: 0.10.0
libtpu: 0.0.40
codegen_flags: <defaults>
</compile_context>

<pallas_src>
import functools

import jax
import jax.numpy as jnp
from jax import lax
from jax.experimental import pallas as pl
from jax.experimental.pallas import tpu as pltpu

HIDDEN = 100        # PyTorch module's hidden width
HIDDEN_PAD = 128    # padded to a full MXU / vreg lane tile
_PART_LANES = 128   # per-tile softmax partials stored broadcast over 128 lanes


# --------------------------------------------------------------------------
# Kernels
# --------------------------------------------------------------------------
def _scores_kernel(x_ref, w1_ref, b1_ref, w2_ref, s_ref, m_ref, l_ref, *,
                   n_valid, n_pad, tile_n, col_matmul):
    # x_ref : (TN, dim)  bf16          w1_ref: (dim, 128) bf16
    # b1_ref: (1, 128)   f32
    # w2_ref: (128, 8)   bf16 (col 0 = w2)     [fast / col_matmul path]
    #         (8, 128)   bf16 (row 0 = w2)     [fallback path]
    # s_ref : (1, TN)    f32  raw scores for this tile, lane-dense
    # m_ref : (1, 128)   f32  this tile's max(s), broadcast over lanes
    # l_ref : (1, 128)   f32  this tile's sum(exp(s - m)), broadcast over lanes

    # Linear(dim, 100->128) + bias + ReLU.  bf16 operands, f32 MXU accumulate.
    h = jnp.dot(x_ref[...], w1_ref[...], preferred_element_type=jnp.float32)
    h = jnp.maximum(h + b1_ref[...], 0.0)                      # (TN, 128) f32
    hb = h.astype(jnp.bfloat16)

    if col_matmul:
        # Linear(128, 1) as a standard (TN,128)@(128,8) matmul; only the small
        # (TN, 8) result is relayouted lane-dense (keeps the XLU off the big
        # activation -- review item on the trans-B dot_general).
        c = jnp.dot(hb, w2_ref[...], preferred_element_type=jnp.float32)
        s = jnp.transpose(c)[0:1, :]                           # (1, TN)
    else:
        # Previously-validated trans-B formulation (conservative fallback).
        s8 = lax.dot_general(w2_ref[...], hb,
                             dimension_numbers=(((1,), (1,)), ((), ())),
                             preferred_element_type=jnp.float32)   # (8, TN)
        s = s8[0:1, :]
    # b2 intentionally omitted: softmax is shift-invariant.

    if n_pad != n_valid:
        # Static: only emitted for ragged batches.  The compare/select is a
        # no-op on full tiles and ~1% of the per-tile budget, so it is not
        # worth a control-flow split.
        lane = lax.broadcasted_iota(jnp.int32, s.shape, 1)
        row = pl.program_id(0) * tile_n + lane
        s = jnp.where(row < n_valid, s, -jnp.inf)

    s_ref[...] = s

    # Per-tile online-softmax partials (every tile has >=1 valid row by
    # construction, so m_tile is always finite and exp(-inf - m_tile) == 0
    # safely drops padded rows).
    m_tile = jnp.max(s, axis=1, keepdims=True)                     # (1, 1)
    l_tile = jnp.sum(jnp.exp(s - m_tile), axis=1, keepdims=True)   # (1, 1)
    m_ref[...] = jnp.broadcast_to(m_tile, m_ref.shape)
    l_ref[...] = jnp.broadcast_to(l_tile, l_ref.shape)


def _normalize_kernel(s_ref, m_ref, l_ref, o_ref):
    # probs = exp(s - m) / l on the full (1, n_pad) lane-dense slab.
    o_ref[...] = jnp.exp(s_ref[...] - m_ref[...]) / l_ref[...]


# --------------------------------------------------------------------------
# Wrapper helpers
# --------------------------------------------------------------------------
def _round_up(x, m):
    return ((x + m - 1) // m) * m


def _vmem_capacity_bytes():
    try:
        return int(pltpu.get_tpu_info().vmem_capacity_bytes)
    except Exception:
        return 64 * 1024 * 1024    # conservative (v7x-sized) default


def _choose_tile(n, dim, vmem_budget):
    # VMEM bytes that scale with tile_n, per batch row:
    #   2 double-buffered bf16 x tiles               : 4 * dim
    #   h / relu / bf16-cast temporaries (f32-ish)   : ~3 * 128 * 4
    #   (TN,8) projection, transpose, s, exp, 2 out  : ~96
    per_row = 4 * dim + 3 * HIDDEN_PAD * 4 + 96
    tn = vmem_budget // per_row
    tn = max(512, min(16 * 1024, (tn // 128) * 128))
    if n <= tn:
        tn = max(8, _round_up(n, 8))   # single tile, sublane-aligned
    return tn


def _scores_call(xp, w1p, b1p, w2p, *, dim, n, n_pad, tile_n, nt, fast,
                 vmem_limit):
    f32 = jnp.float32
    kernel = functools.partial(_scores_kernel, n_valid=n, n_pad=n_pad,
                               tile_n=tile_n, col_matmul=fast)
    # Grid-invariant weights: single-buffer them on the fast path to free VMEM
    # headroom for larger x tiles.
    w_mode = dict(pipeline_mode=pl.Buffered(1)) if fast else {}
    in_specs = [
        pl.BlockSpec((tile_n, dim), lambda i: (i, 0)),             # x: pipelined
        pl.BlockSpec((dim, HIDDEN_PAD), lambda i: (0, 0), **w_mode),
        pl.BlockSpec((1, HIDDEN_PAD), lambda i: (0, 0), **w_mode),
        pl.BlockSpec(w2p.shape, lambda i: (0, 0), **w_mode),
    ]
    return pl.pallas_call(
        kernel,
        out_shape=(
            jax.ShapeDtypeStruct((1, n_pad), f32),                 # raw scores
            jax.ShapeDtypeStruct((1, nt * _PART_LANES), f32),      # per-tile m
            jax.ShapeDtypeStruct((1, nt * _PART_LANES), f32),      # per-tile l
        ),
        grid=(nt,),
        in_specs=in_specs,
        out_specs=(
            pl.BlockSpec((1, tile_n), lambda i: (0, i)),
            pl.BlockSpec((1, _PART_LANES), lambda i: (0, i)),
            pl.BlockSpec((1, _PART_LANES), lambda i: (0, i)),
        ),
        compiler_params=pltpu.CompilerParams(
            dimension_semantics=("parallel",),     # batch tiles split across TCs
            vmem_limit_bytes=vmem_limit),
    )(xp, w1p, b1p, w2p)


def attention_forward(x, w1, b1, w2, b2, *, tile_n=None):
    """x: (N, dim); w1: (dim,100); b1: (100,)/(1,100); w2: (100,1). -> (1, N)."""
    del b2  # softmax shift-invariance: the scalar bias cannot change the output
    n, dim = x.shape
    f32, bf16 = jnp.float32, jnp.bfloat16

    cap = _vmem_capacity_bytes()
    vmem_limit = min(cap // 2, 100 * 1024 * 1024)
    if tile_n is None:
        tile_n = _choose_tile(n, dim, cap // 6)
    n_pad = _round_up(n, tile_n)
    nt = n_pad // tile_n

    # One-time operand prep: dominant stream in bf16, hidden padded 100 -> 128.
    xp = x.astype(bf16)
    if n_pad != n:
        xp = jnp.pad(xp, ((0, n_pad - n), (0, 0)))
    w1p = jnp.zeros((dim, HIDDEN_PAD), bf16).at[:, :HIDDEN].set(w1.astype(bf16))
    b1p = jnp.zeros((1, HIDDEN_PAD), f32).at[:, :HIDDEN].set(
        b1.reshape(1, -1).astype(f32))
    w2f = w2.reshape(-1).astype(bf16)
    w2_col = jnp.zeros((HIDDEN_PAD, 8), bf16).at[:HIDDEN, 0].set(w2f)  # fast
    w2_row = jnp.zeros((8, HIDDEN_PAD), bf16).at[0, :HIDDEN].set(w2f)  # fallback

    common = dict(dim=dim, n=n, n_pad=n_pad, tile_n=tile_n, nt=nt,
                  vmem_limit=vmem_limit)
    try:
        res = _scores_call(xp, w1p, b1p, w2_col, fast=True, **common)
        scores, m_part, l_part = jax.block_until_ready(res)
    except Exception:
        # Conservative, previously-validated configuration (double-buffered
        # weights, trans-B dot_general) if the fast path fails to lower.
        scores, m_part, l_part = _scores_call(xp, w1p, b1p, w2_row, fast=False,
                                              **common)

    # Merge the nt per-tile online-softmax partials (log-sum-exp combine).
    m_cols = m_part.reshape(nt, _PART_LANES)[:, 0]
    l_cols = l_part.reshape(nt, _PART_LANES)[:, 0]
    m_g = jnp.max(m_cols)
    l_g = jnp.sum(l_cols * jnp.exp(m_cols - m_g))
    m_g = m_g.reshape(1, 1)
    l_g = l_g.reshape(1, 1)

    # Collapsed normalize pass: one (1, n_pad) block (scores are only 4N bytes).
    if n_pad <= (1 << 20):
        probs = pl.pallas_call(
            _normalize_kernel,
            out_shape=jax.ShapeDtypeStruct((1, n_pad), f32),
            grid=(1,),
            in_specs=[
                pl.BlockSpec((1, n_pad), lambda i: (0, 0)),
                pl.BlockSpec((1, 1), lambda i: (0, 0)),
                pl.BlockSpec((1, 1), lambda i: (0, 0)),
            ],
            out_specs=pl.BlockSpec((1, n_pad), lambda i: (0, 0)),
            compiler_params=pltpu.CompilerParams(vmem_limit_bytes=vmem_limit),
        )(scores, m_g, l_g)
    else:
        probs = jnp.exp(scores - m_g) / l_g   # XLA fuses this single pass

    return probs[:, :n]


# --------------------------------------------------------------------------
# Demo / self-check
# --------------------------------------------------------------------------
def init_params(key, dim, hidden=HIDDEN):
    # PyTorch-Linear-style uniform init; weights stored pre-transposed (in, out).
    k1, k2, k3, k4 = jax.random.split(key, 4)
    bound1 = 1.0 / jnp.sqrt(dim)
    bound2 = 1.0 / jnp.sqrt(hidden)
    w1 = jax.random.uniform(k1, (dim, hidden), jnp.float32, -bound1, bound1)
    b1 = jax.random.uniform(k2, (1, hidden), jnp.float32, -bound1, bound1)
    w2 = jax.random.uniform(k3, (hidden, 1), jnp.float32, -bound2, bound2)
    b2 = jax.random.uniform(k4, (1, 1), jnp.float32, -bound2, bound2)
    return w1, b1, w2, b2


if __name__ == "__main__":
    key = jax.random.PRNGKey(0)
    kx, kx2, kp = jax.random.split(key, 3)

    DIM = 32
    w1, b1, w2, b2 = init_params(kp, DIM)

    def reference(x):
        # Mirrors the kernel's numerics (bf16 operands, f32 accumulation) and
        # keeps b2 (the kernel drops it -- softmax is shift-invariant).
        h = jnp.dot(x.astype(jnp.bfloat16), w1.astype(jnp.bfloat16),
                    preferred_element_type=jnp.float32)
        h = jnp.maximum(h + b1, 0.0)
        s = jnp.dot(h.astype(jnp.bfloat16), w2.astype(jnp.bfloat16),
                    preferred_element_type=jnp.float32) + b2
        return jax.nn.softmax(s.T, axis=1)

    # Small single-tile case.
    N = 8
    x = jax.random.normal(kx, (N, DIM), jnp.float32)
    out = jax.block_until_ready(attention_forward(x, w1, b1, w2, b2))
    assert out.shape == (1, N), out.shape
    assert jnp.allclose(jnp.sum(out), 1.0, atol=1e-4)
    assert jnp.allclose(out, reference(x), atol=2e-4, rtol=1e-3)

    # Multi-tile + ragged batch: exercises the parallel grid, per-tile softmax
    # partials + merge, and the padded-row masking.
    N2 = 300
    x2 = jax.random.normal(kx2, (N2, DIM), jnp.float32)
    out2 = jax.block_until_ready(attention_forward(x2, w1, b1, w2, b2, tile_n=128))
    assert out2.shape == (1, N2), out2.shape
    assert jnp.allclose(jnp.sum(out2), 1.0, atol=1e-4)
    assert jnp.allclose(out2, reference(x2), atol=2e-4, rtol=1e-3)

    print("KERNEL_OK")
</pallas_src>

<mosaic_0001>
module attributes {stable_mosaic.version = 11 : i64} {
  func.func @_scores_kernel(%arg0: i32, %arg1: memref<8x32xbf16, #tpu.memory_space<vmem>>, %arg2: memref<32x128xbf16, #tpu.memory_space<vmem>>, %arg3: memref<1x128xf32, #tpu.memory_space<vmem>>, %arg4: memref<128x8xbf16, #tpu.memory_space<vmem>>, %arg5: memref<1x8xf32, #tpu.memory_space<vmem>>, %arg6: memref<1x128xf32, #tpu.memory_space<vmem>>, %arg7: memref<1x128xf32, #tpu.memory_space<vmem>>) attributes {dimension_semantics = [#tpu.dimension_semantics<parallel>], iteration_bounds = array<i64: 1>, scalar_prefetch = 0 : i64, scratch_operands = 0 : i64, tpu.core_type = #tpu.core_type<tc>, window_params = [{transform_indices = @transform_0, window_bounds = array<i64: 8, 32>}, {pipeline_mode = #tpu.pipeline_mode<synchronous>, transform_indices = @transform_1, window_bounds = array<i64: 32, 128>}, {pipeline_mode = #tpu.pipeline_mode<synchronous>, transform_indices = @transform_2, window_bounds = array<i64: 1, 128>}, {pipeline_mode = #tpu.pipeline_mode<synchronous>, transform_indices = @transform_3, window_bounds = array<i64: 128, 8>}, {transform_indices = @transform_4, window_bounds = array<i64: 1, 8>}, {transform_indices = @transform_5, window_bounds = array<i64: 1, 128>}, {transform_indices = @transform_6, window_bounds = array<i64: 1, 128>}]} {
    %c0 = arith.constant 0 : index
    %c0_0 = arith.constant 0 : index
    %0 = vector.load %arg1[%c0, %c0_0] : memref<8x32xbf16, #tpu.memory_space<vmem>>, vector<8x32xbf16>
    %c0_1 = arith.constant 0 : index
    %c0_2 = arith.constant 0 : index
    %1 = vector.load %arg2[%c0_1, %c0_2] : memref<32x128xbf16, #tpu.memory_space<vmem>>, vector<32x128xbf16>
    %cst = arith.constant dense<0.000000e+00> : vector<8x128xf32>
    %2 = tpu.matmul %0, %1, %cst {dimension_numbers = #tpu.dot_dimension_numbers<[1], [0], [0], [1], [0, 0, 1, 1], [], []>} : vector<8x32xbf16>, vector<32x128xbf16>, vector<8x128xf32> -> vector<8x128xf32>
    %c0_3 = arith.constant 0 : index
    %c0_4 = arith.constant 0 : index
    %3 = vector.load %arg3[%c0_3, %c0_4] : memref<1x128xf32, #tpu.memory_space<vmem>>, vector<1x128xf32>
    %4 = vector.broadcast %3 : vector<1x128xf32> to vector<8x128xf32>
    %5 = arith.addf %2, %4 : vector<8x128xf32>
    %cst_5 = arith.constant 0.000000e+00 : f32
    %6 = vector.broadcast %cst_5 : f32 to vector<8x128xf32>
    %7 = arith.maximumf %5, %6 : vector<8x128xf32>
    %8 = arith.truncf %7 : vector<8x128xf32> to vector<8x128xbf16>
    %c0_6 = arith.constant 0 : index
    %c0_7 = arith.constant 0 : index
    %9 = vector.load %arg4[%c0_6, %c0_7] : memref<128x8xbf16, #tpu.memory_space<vmem>>, vector<128x8xbf16>
    %cst_8 = arith.constant dense<0.000000e+00> : vector<8x8xf32>
    %10 = tpu.matmul %8, %9, %cst_8 {dimension_numbers = #tpu.dot_dimension_numbers<[1], [0], [0], [1], [0, 0, 1, 1], [], []>} : vector<8x128xbf16>, vector<128x8xbf16>, vector<8x8xf32> -> vector<8x8xf32>
    %11 = tpu.transpose %10, [1, 0] : vector<8x8xf32> -> vector<8x8xf32>
    %12 = vector.extract_strided_slice %11 {offsets = [0, 0], sizes = [1, 8], strides = [1, 1]} : vector<8x8xf32> to vector<1x8xf32>
    %c0_9 = arith.constant 0 : index
    %c0_10 = arith.constant 0 : index
    %13 = vector.load %arg5[%c0_9, %c0_10] : memref<1x8xf32, #tpu.memory_space<vmem>>, vector<1x8xf32>
    tpu.vector_store %arg5[%c0_9, %c0_10], %12 {strides = array<i32>} : memref<1x8xf32, #tpu.memory_space<vmem>>, vector<1x8xf32>,
    %cst_11 = arith.constant dense<0xFF800000> : vector<1xf32>
    %14 = vector.multi_reduction <maximumf>, %12, %cst_11 [1] : vector<1x8xf32> to vector<1xf32>
    %15 = vector.shape_cast %14 : vector<1xf32> to vector<1x1xf32>
    %16 = vector.broadcast %15 : vector<1x1xf32> to vector<1x8xf32>
    %17 = arith.subf %12, %16 : vector<1x8xf32>
    %18 = math.exp %17 : vector<1x8xf32>
    %cst_12 = arith.constant dense<0.000000e+00> : vector<1xf32>
    %19 = vector.multi_reduction <add>, %18, %cst_12 [1] : vector<1x8xf32> to vector<1xf32>
    %20 = vector.shape_cast %19 : vector<1xf32> to vector<1x1xf32>
    %21 = vector.shape_cast %15 : vector<1x1xf32> to vector<1x1xf32>
    %22 = vector.broadcast %21 : vector<1x1xf32> to vector<1x128xf32>
    %c0_13 = arith.constant 0 : index
    %c0_14 = arith.constant 0 : index
    %23 = vector.load %arg6[%c0_13, %c0_14] : memref<1x128xf32, #tpu.memory_space<vmem>>, vector<1x128xf32>
    tpu.vector_store %arg6[%c0_13, %c0_14], %22 {strides = array<i32>} : memref<1x128xf32, #tpu.memory_space<vmem>>, vector<1x128xf32>,
    %24 = vector.shape_cast %20 : vector<1x1xf32> to vector<1x1xf32>
    %25 = vector.broadcast %24 : vector<1x1xf32> to vector<1x128xf32>
    %c0_15 = arith.constant 0 : index
    %c0_16 = arith.constant 0 : index
    %26 = vector.load %arg7[%c0_15, %c0_16] : memref<1x128xf32, #tpu.memory_space<vmem>>, vector<1x128xf32>
    tpu.vector_store %arg7[%c0_15, %c0_16], %25 {strides = array<i32>} : memref<1x128xf32, #tpu.memory_space<vmem>>, vector<1x128xf32>,
    return
  }
  func.func @transform_0(%arg0: i32) -> (i32, i32) {
    %c0_i32 = arith.constant 0 : i32
    %c0_i32_0 = arith.constant 0 : i32
    return %arg0, %c0_i32 : i32, i32
  }
  func.func @transform_1(%arg0: i32) -> (i32, i32) {
    %c0_i32 = arith.constant 0 : i32
    %c0_i32_0 = arith.constant 0 : i32
    %c0_i32_1 = arith.constant 0 : i32
    return %c0_i32, %c0_i32_0 : i32, i32
  }
  func.func @transform_2(%arg0: i32) -> (i32, i32) {
    %c0_i32 = arith.constant 0 : i32
    %c0_i32_0 = arith.constant 0 : i32
    %c0_i32_1 = arith.constant 0 : i32
    return %c0_i32, %c0_i32_0 : i32, i32
  }
  func.func @transform_3(%arg0: i32) -> (i32, i32) {
    %c0_i32 = arith.constant 0 : i32
    %c0_i32_0 = arith.constant 0 : i32
    %c0_i32_1 = arith.constant 0 : i32
    return %c0_i32, %c0_i32_0 : i32, i32
  }
  func.func @transform_4(%arg0: i32) -> (i32, i32) {
    %c0_i32 = arith.constant 0 : i32
    %c0_i32_0 = arith.constant 0 : i32
    return %c0_i32, %arg0 : i32, i32
  }
  func.func @transform_5(%arg0: i32) -> (i32, i32) {
    %c0_i32 = arith.constant 0 : i32
    %c0_i32_0 = arith.constant 0 : i32
    return %c0_i32, %arg0 : i32, i32
  }
  func.func @transform_6(%arg0: i32) -> (i32, i32) {
    %c0_i32 = arith.constant 0 : i32
    %c0_i32_0 = arith.constant 0 : i32
    return %c0_i32, %arg0 : i32, i32
  }
}

module attributes {stable_mosaic.version = 11 : i64} {
  func.func @_scores_kernel(%arg0: i32, %arg1: memref<8x32xbf16, #tpu.memory_space<vmem>>, %arg2: memref<32x128xbf16, #tpu.memory_space<vmem>>, %arg3: memref<1x128xf32, #tpu.memory_space<vmem>>, %arg4: memref<8x128xbf16, #tpu.memory_space<vmem>>, %arg5: memref<1x8xf32, #tpu.memory_space<vmem>>, %arg6: memref<1x128xf32, #tpu.memory_space<vmem>>, %arg7: memref<1x128xf32, #tpu.memory_space<vmem>>) attributes {dimension_semantics = [#tpu.dimension_semantics<parallel>], iteration_bounds = array<i64: 1>, scalar_prefetch = 0 : i64, scratch_operands = 0 : i64, tpu.core_type = #tpu.core_type<tc>, window_params = [{transform_indices = @transform_0, window_bounds = array<i64: 8, 32>}, {pipeline_mode = #tpu.pipeline_mode<synchronous>, transform_indices = @transform_1, window_bounds = array<i64: 32, 128>}, {pipeline_mode = #tpu.pipeline_mode<synchronous>, transform_indices = @transform_2, window_bounds = array<i64: 1, 128>}, {pipeline_mode = #tpu.pipeline_mode<synchronous>, transform_indices = @transform_3, window_bounds = array<i64: 8, 128>}, {transform_indices = @transform_4, window_bounds = array<i64: 1, 8>}, {transform_indices = @transform_5, window_bounds = array<i64: 1, 128>}, {transform_indices = @transform_6, window_bounds = array<i64: 1, 128>}]} {
    %c0 = arith.constant 0 : index
    %c0_0 = arith.constant 0 : index
    %0 = vector.load %arg1[%c0, %c0_0] : memref<8x32xbf16, #tpu.memory_space<vmem>>, vector<8x32xbf16>
    %c0_1 = arith.constant 0 : index
    %c0_2 = arith.constant 0 : index
    %1 = vector.load %arg2[%c0_1, %c0_2] : memref<32x128xbf16, #tpu.memory_space<vmem>>, vector<32x128xbf16>
    %cst = arith.constant dense<0.000000e+00> : vector<8x128xf32>
    %2 = tpu.matmul %0, %1, %cst {dimension_numbers = #tpu.dot_dimension_numbers<[1], [0], [0], [1], [0, 0, 1, 1], [], []>} : vector<8x32xbf16>, vector<32x128xbf16>, vector<8x128xf32> -> vector<8x128xf32>
    %c0_3 = arith.constant 0 : index
    %c0_4 = arith.constant 0 : index
    %3 = vector.load %arg3[%c0_3, %c0_4] : memref<1x128xf32, #tpu.memory_space<vmem>>, vector<1x128xf32>
    %4 = vector.broadcast %3 : vector<1x128xf32> to vector<8x128xf32>
    %5 = arith.addf %2, %4 : vector<8x128xf32>
    %cst_5 = arith.constant 0.000000e+00 : f32
    %6 = vector.broadcast %cst_5 : f32 to vector<8x128xf32>
    %7 = arith.maximumf %5, %6 : vector<8x128xf32>
    %8 = arith.truncf %7 : vector<8x128xf32> to vector<8x128xbf16>
    %c0_6 = arith.constant 0 : index
    %c0_7 = arith.constant 0 : index
    %9 = vector.load %arg4[%c0_6, %c0_7] : memref<8x128xbf16, #tpu.memory_space<vmem>>, vector<8x128xbf16>
    %cst_8 = arith.constant dense<0.000000e+00> : vector<8x8xf32>
    %10 = tpu.matmul %9, %8, %cst_8 {dimension_numbers = #tpu.dot_dimension_numbers<[1], [1], [0], [0], [0, 0, 1, 0], [], []>} : vector<8x128xbf16>, vector<8x128xbf16>, vector<8x8xf32> -> vector<8x8xf32>
    %11 = vector.extract_strided_slice %10 {offsets = [0, 0], sizes = [1, 8], strides = [1, 1]} : vector<8x8xf32> to vector<1x8xf32>
    %c0_9 = arith.constant 0 : index
    %c0_10 = arith.constant 0 : index
    %12 = vector.load %arg5[%c0_9, %c0_10] : memref<1x8xf32, #tpu.memory_space<vmem>>, vector<1x8xf32>
    tpu.vector_store %arg5[%c0_9, %c0_10], %11 {strides = array<i32>} : memref<1x8xf32, #tpu.memory_space<vmem>>, vector<1x8xf32>,
    %cst_11 = arith.constant dense<0xFF800000> : vector<1xf32>
    %13 = vector.multi_reduction <maximumf>, %11, %cst_11 [1] : vector<1x8xf32> to vector<1xf32>
    %14 = vector.shape_cast %13 : vector<1xf32> to vector<1x1xf32>
    %15 = vector.broadcast %14 : vector<1x1xf32> to vector<1x8xf32>
    %16 = arith.subf %11, %15 : vector<1x8xf32>
    %17 = math.exp %16 : vector<1x8xf32>
    %cst_12 = arith.constant dense<0.000000e+00> : vector<1xf32>
    %18 = vector.multi_reduction <add>, %17, %cst_12 [1] : vector<1x8xf32> to vector<1xf32>
    %19 = vector.shape_cast %18 : vector<1xf32> to vector<1x1xf32>
    %20 = vector.shape_cast %14 : vector<1x1xf32> to vector<1x1xf32>
    %21 = vector.broadcast %20 : vector<1x1xf32> to vector<1x128xf32>
    %c0_13 = arith.constant 0 : index
    %c0_14 = arith.constant 0 : index
    %22 = vector.load %arg6[%c0_13, %c0_14] : memref<1x128xf32, #tpu.memory_space<vmem>>, vector<1x128xf32>
    tpu.vector_store %arg6[%c0_13, %c0_14], %21 {strides = array<i32>} : memref<1x128xf32, #tpu.memory_space<vmem>>, vector<1x128xf32>,
    %23 = vector.shape_cast %19 : vector<1x1xf32> to vector<1x1xf32>
    %24 = vector.broadcast %23 : vector<1x1xf32> to vector<1x128xf32>
    %c0_15 = arith.constant 0 : index
    %c0_16 = arith.constant 0 : index
    %25 = vector.load %arg7[%c0_15, %c0_16] : memref<1x128xf32, #tpu.memory_space<vmem>>, vector<1x128xf32>
    tpu.vector_store %arg7[%c0_15, %c0_16], %24 {strides = array<i32>} : memref<1x128xf32, #tpu.memory_space<vmem>>, vector<1x128xf32>,
    return
  }
  func.func @transform_0(%arg0: i32) -> (i32, i32) {
    %c0_i32 = arith.constant 0 : i32
    %c0_i32_0 = arith.constant 0 : i32
    return %arg0, %c0_i32 : i32, i32
  }
  func.func @transform_1(%arg0: i32) -> (i32, i32) {
    %c0_i32 = arith.constant 0 : i32
    %c0_i32_0 = arith.constant 0 : i32
    %c0_i32_1 = arith.constant 0 : i32
    return %c0_i32, %c0_i32_0 : i32, i32
  }
  func.func @transform_2(%arg0: i32) -> (i32, i32) {
    %c0_i32 = arith.constant 0 : i32
    %c0_i32_0 = arith.constant 0 : i32
    %c0_i32_1 = arith.constant 0 : i32
    return %c0_i32, %c0_i32_0 : i32, i32
  }
  func.func @transform_3(%arg0: i32) -> (i32, i32) {
    %c0_i32 = arith.constant 0 : i32
    %c0_i32_0 = arith.constant 0 : i32
    %c0_i32_1 = arith.constant 0 : i32
    return %c0_i32, %c0_i32_0 : i32, i32
  }
  func.func @transform_4(%arg0: i32) -> (i32, i32) {
    %c0_i32 = arith.constant 0 : i32
    %c0_i32_0 = arith.constant 0 : i32
    return %c0_i32, %arg0 : i32, i32
  }
  func.func @transform_5(%arg0: i32) -> (i32, i32) {
    %c0_i32 = arith.constant 0 : i32
    %c0_i32_0 = arith.constant 0 : i32
    return %c0_i32, %arg0 : i32, i32
  }
  func.func @transform_6(%arg0: i32) -> (i32, i32) {
    %c0_i32 = arith.constant 0 : i32
    %c0_i32_0 = arith.constant 0 : i32
    return %c0_i32, %arg0 : i32, i32
  }
}

</mosaic_0001>

<llo_original>
// kernel: tpu_custom_call.1
$region0: #{tpu_custom_call.1}
  #allocation0 [shape = 'u32[]', space=smem, size = 0x4, offset = 0x4, fixed_abs, tag = 'smem constant byte address 0x4 - core index']
  #allocation1 [shape = 'u32[72,128]{1,0:T(1,128)}', space=vmem, size = 0x9000, scoped, tag = 'internal scratch']
  %s0 = inlined_call_operand.vmem [shape: bf16[8,32], index: 0, kind: input, shape index: {}]
  %s1 = inlined_call_operand.vmem [shape: bf16[32,128], index: 1, kind: input, shape index: {}]
  %s2 = inlined_call_operand.vmem [shape: f32[1,128], index: 2, kind: input, shape index: {}]
  %s3 = inlined_call_operand.vmem [shape: bf16[128,8], index: 3, kind: input, shape index: {}]
  %s4 = inlined_call_operand.hbm [shape: f32[1,8], index: 4, kind: output, shape index: {0}]
  %s5 = inlined_call_operand.hbm [shape: f32[1,128], index: 5, kind: output, shape index: {1}]
  %s6 = inlined_call_operand.hbm [shape: f32[1,128], index: 6, kind: output, shape index: {2}]
  %7 = xla_tuple %s4, %s5, %s6
  %s8 = sld [smem:[#allocation0]]
  $region42: #{tpu_custom_call.1} parent=0
    _
  %s10 = ssub.s32 1, %s8
  %s11 = scalar_select 0, %s10, %s8
  $region1: #{tpu_custom_call.1} parent=0
    #allocation2 [shape = 'u8[512]{0}', space=vmem, size = 0x400, scoped, tag = 'output window, operand 0, single buffered']
    #allocation3 [shape = 's32[1]{0}', space=sflag, size = 0x4, scoped, tag = 'scoped memory for tpu_custom_call.1']
    #allocation4 [shape = 'u8[512]{0}', space=vmem, size = 0x400, scoped, tag = 'output window, operand 1, single buffered']
    #allocation5 [shape = 's32[1]{0}', space=sflag, size = 0x4, scoped, tag = 'scoped memory for tpu_custom_call.1']
    #allocation6 [shape = 'u8[512]{0}', space=vmem, size = 0x400, scoped, tag = 'output window, operand 2, single buffered']
    %12 = vsyncpa [#allocation3], 0
    %13 = vsyncpa [#allocation5], 0
    // Predicated region
    $region2: #{tpu_custom_call.1} parent=1 // pred_check
      _
    $region3: #{tpu_custom_call.1} parent=1 // pred_check_branch
      %15 = sbr.rel (0) target = $region5
    $region4: #{tpu_custom_call.1} parent=1 // pred_region
      _
    $region5: #{tpu_custom_call.1} parent=1 // pred_fallthru
      _
    // Predicated region
    $region6: #{tpu_custom_call.1} parent=1 // pred_check
      _
    $region7: #{tpu_custom_call.1} parent=1 // pred_check_branch
      %17 = sbr.rel (0) target = $region9
    $region8: #{tpu_custom_call.1} parent=1 // pred_region
      _
    $region9: #{tpu_custom_call.1} parent=1 // pred_fallthru
      _
    // Predicated region
    $region10: #{tpu_custom_call.1} parent=1 // pred_check
      _
    $region11: #{tpu_custom_call.1} parent=1 // pred_check_branch
      %19 = sbr.rel (0) target = $region13
    $region12: #{tpu_custom_call.1} parent=1 // pred_region
      _
    $region13: #{tpu_custom_call.1} parent=1 // pred_fallthru
      _
    // Predicated region
    $region14: #{tpu_custom_call.1} parent=1 // pred_check
      _
    $region15: #{tpu_custom_call.1} parent=1 // pred_check_branch
      %21 = sbr.rel (0) target = $region17
    $region16: #{tpu_custom_call.1} parent=1 // pred_region
      _
    $region17: #{tpu_custom_call.1} parent=1 // pred_fallthru
      _
    %v23 = vld [vmem:[%s0] sm:$0xf]
    %v24 = vld [vmem:[%s1] sm:$0xf]
    %v25 = vld [vmem:[%s1 + $0x4] sm:$0xf]
    %v26 = vld [vmem:[%s1 + $0x8] sm:$0xf]
    %v27 = vld [vmem:[%s1 + $0xc] sm:$0xf]
    %v28 = vld [vmem:[%s2] sm:$0x1]
    %v30 = vperm.slane %v28, 0
    %v36 = vunpack.c.l.b16 %v24
    %v37 = vunpack.c.l.b16 %v25
    %v38 = vunpack.c.l.b16 %v26
    %v39 = vunpack.c.l.b16 %v27
    %v40 = vpack.c.b16 %v37, %v36
    %v41 = vpack.c.b16 %v39, %v38
    %vm44 = vcmask 261120
    %v46 = vsel %vm44, %v23, 0
    %48 = vmatpush.bf16.msra.mxu0 0
    %49 = vmatpush.bf16.msra.mxu0 0
    %50 = vmatpush.bf16.msra.mxu0 0
    %51 = vmatpush.bf16.msra.mxu0 0
    %52 = vmatpush.bf16.msra.mxu0 0
    %53 = vmatpush.bf16.msra.mxu0 0
    %54 = vmatpush.bf16.msra.mxu0 %v41
    %55 = vmatpush.bf16.msra.mxu0 %v40
    %56 = vmatmul.bf16.gmra.mxu0 %v46
    %v57 = vpop.f32.mrf.mxu0
    %v58 = vadd.f32 %v30, %v57
    %v59 = vpop.f32.mrf.mxu0
    %60 = vdwg.mxu0
    %v61 = vmax.f32 %v58, 0.0
    %v62 = vpack.c.bf16 %v61, %v61
    %v63 = vld [vmem:[%s3] sm:$0xf]
    %v64 = vld [vmem:[%s3 + $0x4] sm:$0xf]
    %v65 = vld [vmem:[%s3 + $0x8] sm:$0xf]
    %v66 = vld [vmem:[%s3 + $0xc] sm:$0xf]
    %v67 = vld [vmem:[%s3 + $0x10] sm:$0xf]
    %v68 = vld [vmem:[%s3 + $0x14] sm:$0xf]
    %v69 = vld [vmem:[%s3 + $0x18] sm:$0xf]
    %v70 = vld [vmem:[%s3 + $0x1c] sm:$0xf]
    %v71 = vld [vmem:[%s3 + $0x20] sm:$0xf]
    %v72 = vld [vmem:[%s3 + $0x24] sm:$0xf]
    %v73 = vld [vmem:[%s3 + $0x28] sm:$0xf]
    %v74 = vld [vmem:[%s3 + $0x2c] sm:$0xf]
    %v75 = vld [vmem:[%s3 + $0x30] sm:$0xf]
    %v76 = vld [vmem:[%s3 + $0x34] sm:$0xf]
    %v77 = vld [vmem:[%s3 + $0x38] sm:$0xf]
    %v78 = vld [vmem:[%s3 + $0x3c] sm:$0xf]
    %v95 = vunpack.c.l.b16 %v63
    %v96 = vunpack.c.l.b16 %v64
    %v97 = vunpack.c.l.b16 %v65
    %v98 = vunpack.c.l.b16 %v66
    %v99 = vunpack.c.l.b16 %v67
    %v100 = vunpack.c.l.b16 %v68
    %v101 = vunpack.c.l.b16 %v69
    %v102 = vunpack.c.l.b16 %v70
    %v103 = vunpack.c.l.b16 %v71
    %v104 = vunpack.c.l.b16 %v72
    %v105 = vunpack.c.l.b16 %v73
    %v106 = vunpack.c.l.b16 %v74
    %v107 = vunpack.c.l.b16 %v75
    %v108 = vunpack.c.l.b16 %v76
    %v109 = vunpack.c.l.b16 %v77
    %v110 = vunpack.c.l.b16 %v78
    %v111 = vpack.c.b16 %v96, %v95
    %v112 = vpack.c.b16 %v98, %v97
    %v113 = vpack.c.b16 %v100, %v99
    %v114 = vpack.c.b16 %v102, %v101
    %v115 = vpack.c.b16 %v104, %v103
    %v116 = vpack.c.b16 %v106, %v105
    %v117 = vpack.c.b16 %v108, %v107
    %v118 = vpack.c.b16 %v110, %v109
    %127 = vmatpush.bf16.msra.mxu0 %v118
    %128 = vmatpush.bf16.msra.mxu0 %v117
    %129 = vmatpush.bf16.msra.mxu0 %v116
    %130 = vmatpush.bf16.msra.mxu0 %v115
    %131 = vmatpush.bf16.msra.mxu0 %v114
    %132 = vmatpush.bf16.msra.mxu0 %v113
    %133 = vmatpush.bf16.msra.mxu0 %v112
    %134 = vmatpush.bf16.msra.mxu0 %v111
    %135 = vmatmul.bf16.gmra.mxu0 %v62
    %v136 = vpop.f32.mrf.mxu0
    %v137 = vadd.f32 0.0, %v136
    %v138 = vpop.f32.mrf.mxu0
    %139 = vdwg.mxu0
    %140 = vxpose.xlu0.b32.start [1/16] %v137, 128
    %141 = vxpose.xlu0.b32.cont [2/16] 0.0, 128
    %142 = vxpose.xlu0.b32.cont [3/16] 0.0, 128
    %143 = vxpose.xlu0.b32.cont [4/16] 0.0, 128
    %144 = vxpose.xlu0.b32.cont [5/16] 0.0, 128
    %145 = vxpose.xlu0.b32.cont [6/16] 0.0, 128
    %146 = vxpose.xlu0.b32.cont [7/16] 0.0, 128
    %147 = vxpose.xlu0.b32.cont [8/16] 0.0, 128
    %148 = vxpose.xlu0.b32.cont [9/16] 0.0, 128
    %149 = vxpose.xlu0.b32.cont [10/16] 0.0, 128
    %150 = vxpose.xlu0.b32.cont [11/16] 0.0, 128
    %151 = vxpose.xlu0.b32.cont [12/16] 0.0, 128
    %152 = vxpose.xlu0.b32.cont [13/16] 0.0, 128
    %153 = vxpose.xlu0.b32.cont [14/16] 0.0, 128
    %154 = vxpose.xlu0.b32.cont [15/16] 0.0, 128
    %155 = vxpose.xlu0.b32.end [16/16] 0.0, 128
    %v156 = vpop.trf.xlu0
    %v157 = vpop.trf.xlu0
    %v158 = vpop.trf.xlu0
    %v159 = vpop.trf.xlu0
    %v160 = vpop.trf.xlu0
    %v161 = vpop.trf.xlu0
    %v162 = vpop.trf.xlu0
    %v163 = vpop.trf.xlu0
    %v164 = vpop.trf.xlu0
    %v165 = vpop.trf.xlu0
    %v166 = vpop.trf.xlu0
    %v167 = vpop.trf.xlu0
    %v168 = vpop.trf.xlu0
    %v169 = vpop.trf.xlu0
    %v170 = vpop.trf.xlu0
    %v171 = vpop.trf.xlu0
    %vm172 = vcmask 57344
    %173 = vst.msk [vmem:[#allocation2] sm:$0x1] %vm172, %v156
    %v174 = vsel %vm172, %v156, -inf
    %175 = vmax.xlane.f32.xlu0 %v174
    %v176 = vpop.xlane.xlu0 %175
    %v177 = vsub.f32 %v156, %v176
    %v178 = vmul.f32 %v177, 1.442695
    %v179 = vpow.pop %v178
    %v180 = vsel %vm172, %v179, 0.0
    %181 = vadd.xlane.f32.xlu0 %v180
    %v182 = vpop.xlane.xlu0 %181
    %183 = vst [vmem:[#allocation4] sm:$0x1] %v176
    %184 = vst [vmem:[#allocation6] sm:$0x1] %v182
    // Predicated region
    $region18: #{tpu_custom_call.1} parent=1 // pred_check
      _
    $region19: #{tpu_custom_call.1} parent=1 // pred_check_branch
      %186 = sbr.rel (0) target = $region21
    $region20: #{tpu_custom_call.1} parent=1 // pred_region
      %188 = vsyncadd [#allocation3], 0
      %s190 = sshll.u32 [#allocation2], 4
      %s191 = int_to_ptr.vmem [resolvable:$true] %s190
      %s192 = sshll.u32 %s4, 4
      %s193 = int_to_ptr.hbm [resolvable:$true] %s192
      %195 = dma.vmem_to_hbm [thread:$0]  %s191, 16, %s193, [#allocation3]
    $region21: #{tpu_custom_call.1} parent=1 // pred_fallthru
      _
    // Predicated region
    $region22: #{tpu_custom_call.1} parent=1 // pred_check
      _
    $region23: #{tpu_custom_call.1} parent=1 // pred_check_branch
      %197 = sbr.rel (0) target = $region25
    $region24: #{tpu_custom_call.1} parent=1 // pred_region
      %199 = vsyncadd [#allocation5], 0
      %s201 = sshll.u32 [#allocation4], 4
      %s202 = int_to_ptr.vmem [resolvable:$true] %s201
      %s203 = sshll.u32 %s5, 4
      %s204 = int_to_ptr.hbm [resolvable:$true] %s203
      %206 = dma.vmem_to_hbm [thread:$0]  %s202, 16, %s204, [#allocation5]
    $region25: #{tpu_custom_call.1} parent=1 // pred_fallthru
      _
    // Predicated region
    $region26: #{tpu_custom_call.1} parent=1 // pred_check
      _
    $region27: #{tpu_custom_call.1} parent=1 // pred_check_branch
      %208 = sbr.rel (0) target = $region29
    $region28: #{tpu_custom_call.1} parent=1 // pred_region
      %210 = vsyncadd [#allocation5], 0
      %s212 = sshll.u32 [#allocation6], 4
      %s213 = int_to_ptr.vmem [resolvable:$true] %s212
      %s214 = sshll.u32 %s6, 4
      %s215 = int_to_ptr.hbm [resolvable:$true] %s214
      %217 = dma.vmem_to_hbm [thread:$0]  %s213, 16, %s215, [#allocation5]
    $region29: #{tpu_custom_call.1} parent=1 // pred_fallthru
      _
    // Predicated region
    $region30: #{tpu_custom_call.1} parent=1 // pred_check
      _
    $region31: #{tpu_custom_call.1} parent=1 // pred_check_branch
      %219 = sbr.rel (0) target = $region33
    $region32: #{tpu_custom_call.1} parent=1 // pred_region
      %221 = dma.done [#allocation3], 16
    $region33: #{tpu_custom_call.1} parent=1 // pred_fallthru
      _
    // Predicated region
    $region34: #{tpu_custom_call.1} parent=1 // pred_check
      _
    $region35: #{tpu_custom_call.1} parent=1 // pred_check_branch
      %223 = sbr.rel (0) target = $region37
    $region36: #{tpu_custom_call.1} parent=1 // pred_region
      %225 = dma.done [#allocation5], 16
    $region37: #{tpu_custom_call.1} parent=1 // pred_fallthru
      _
    // Predicated region
    $region38: #{tpu_custom_call.1} parent=1 // pred_check
      _
    $region39: #{tpu_custom_call.1} parent=1 // pred_check_branch
      %227 = sbr.rel (0) target = $region41
    $region40: #{tpu_custom_call.1} parent=1 // pred_region
      %229 = dma.done [#allocation5], 16
    $region41: #{tpu_custom_call.1} parent=1 // pred_fallthru
      _
    %230 = vsyncpa [#allocation3], 1
    %231 = vsyncpa [#allocation5], 1

// kernel: tpu_custom_call.1
$region0: #{tpu_custom_call.1}
  #allocation0 [shape = 'u32[]', space=smem, size = 0x4, offset = 0x4, fixed_abs, tag = 'smem constant byte address 0x4 - core index']
  #allocation1 [shape = 'u32[72,128]{1,0:T(1,128)}', space=vmem, size = 0x9000, scoped, tag = 'internal scratch']
  %s0 = inlined_call_operand.hbm [shape: bf16[8,32], index: 0, kind: input, shape index: {}]
  %s1 = inlined_call_operand.hbm [shape: bf16[32,128], index: 1, kind: input, shape index: {}]
  %s2 = inlined_call_operand.vmem [shape: f32[1,128], index: 2, kind: input, shape index: {}]
  %s3 = inlined_call_operand.hbm [shape: bf16[8,128], index: 3, kind: input, shape index: {}]
  %s4 = inlined_call_operand.hbm [shape: f32[1,8], index: 4, kind: output, shape index: {0}]
  %s5 = inlined_call_operand.hbm [shape: f32[1,128], index: 5, kind: output, shape index: {1}]
  %s6 = inlined_call_operand.hbm [shape: f32[1,128], index: 6, kind: output, shape index: {2}]
  %7 = xla_tuple %s4, %s5, %s6
  %s8 = sld [smem:[#allocation0]]
  $region54: #{tpu_custom_call.1} parent=0
    _
  %s10 = ssub.s32 1, %s8
  %s11 = scalar_select 0, %s10, %s8
  $region1: #{tpu_custom_call.1} parent=0
    #allocation2 [shape = 'u8[2048]{0}', space=vmem, size = 0x800, scoped, tag = 'input window, operand 0, single buffered']
    #allocation3 [shape = 's32[1]{0}', space=sflag, size = 0x4, scoped, tag = 'scoped memory for tpu_custom_call.1']
    #allocation4 [shape = 's32[1]{0}', space=sflag, size = 0x4, scoped, tag = 'scoped memory for tpu_custom_call.1']
    #allocation5 [shape = 'u8[8192]{0}', space=vmem, size = 0x2000, scoped, tag = 'input window, operand 1, single buffered']
    #allocation6 [shape = 's32[1]{0}', space=sflag, size = 0x4, scoped, tag = 'scoped memory for tpu_custom_call.1']
    #allocation7 [shape = 'u8[2048]{0}', space=vmem, size = 0x800, scoped, tag = 'input window, operand 3, single buffered']
    #allocation8 [shape = 'u8[512]{0}', space=vmem, size = 0x400, scoped, tag = 'output window, operand 0, single buffered']
    #allocation9 [shape = 'u8[512]{0}', space=vmem, size = 0x400, scoped, tag = 'output window, operand 1, single buffered']
    #allocation10 [shape = 's32[1]{0}', space=sflag, size = 0x4, scoped, tag = 'scoped memory for tpu_custom_call.1']
    #allocation11 [shape = 'u8[512]{0}', space=vmem, size = 0x400, scoped, tag = 'output window, operand 2, single buffered']
    %12 = vsyncpa [#allocation3], 0
    %13 = vsyncpa [#allocation6], 0
    %14 = vsyncpa [#allocation4], 0
    %15 = vsyncpa [#allocation10], 0
    // Predicated region
    $region2: #{tpu_custom_call.1} parent=1 // pred_check
      _
    $region3: #{tpu_custom_call.1} parent=1 // pred_check_branch
      %17 = sbr.rel (0) target = $region5
    $region4: #{tpu_custom_call.1} parent=1 // pred_region
      %19 = vsyncadd [#allocation3], 0
      %s21 = sshll.u32 %s0, 4
      %s22 = int_to_ptr.hbm [resolvable:$true] %s21
      %s23 = sshll.u32 [#allocation2], 4
      %s24 = int_to_ptr.vmem [resolvable:$true] %s23
      %26 = dma.hbm_to_vmem [thread:$0]  %s22, 64, %s24, [#allocation3]
    $region5: #{tpu_custom_call.1} parent=1 // pred_fallthru
      _
    // Predicated region
    $region6: #{tpu_custom_call.1} parent=1 // pred_check
      _
    $region7: #{tpu_custom_call.1} parent=1 // pred_check_branch
      %28 = sbr.rel (0) target = $region9
    $region8: #{tpu_custom_call.1} parent=1 // pred_region
      %30 = vsyncadd [#allocation6], 0
      %s31 = sshll.u32 %s1, 4
      %s32 = int_to_ptr.hbm [resolvable:$true] %s31
      %s33 = sshll.u32 [#allocation5], 4
      %s34 = int_to_ptr.vmem [resolvable:$true] %s33
      %39 = dma.hbm_to_vmem [thread:$0]  %s32, 256, %s34, [#allocation6], 64, 64, 4
    $region9: #{tpu_custom_call.1} parent=1 // pred_fallthru
      _
    // Predicated region
    $region10: #{tpu_custom_call.1} parent=1 // pred_check
      _
    $region11: #{tpu_custom_call.1} parent=1 // pred_check_branch
      %41 = sbr.rel (0) target = $region13
    $region12: #{tpu_custom_call.1} parent=1 // pred_region
      _
    $region13: #{tpu_custom_call.1} parent=1 // pred_fallthru
      _
    // Predicated region
    $region14: #{tpu_custom_call.1} parent=1 // pred_check
      _
    $region15: #{tpu_custom_call.1} parent=1 // pred_check_branch
      %43 = sbr.rel (0) target = $region17
    $region16: #{tpu_custom_call.1} parent=1 // pred_region
      %45 = vsyncadd [#allocation6], 0
      %s47 = sshll.u32 %s3, 4
      %s48 = int_to_ptr.hbm [resolvable:$true] %s47
      %s49 = sshll.u32 [#allocation7], 4
      %s50 = int_to_ptr.vmem [resolvable:$true] %s49
      %52 = dma.hbm_to_vmem [thread:$0]  %s48, 64, %s50, [#allocation6]
    $region17: #{tpu_custom_call.1} parent=1 // pred_fallthru
      _
    // Predicated region
    $region18: #{tpu_custom_call.1} parent=1 // pred_check
      _
    $region19: #{tpu_custom_call.1} parent=1 // pred_check_branch
      %54 = sbr.rel (0) target = $region21
    $region20: #{tpu_custom_call.1} parent=1 // pred_region
      %56 = dma.done [#allocation3], 64
    $region21: #{tpu_custom_call.1} parent=1 // pred_fallthru
      _
    // Predicated region
    $region22: #{tpu_custom_call.1} parent=1 // pred_check
      _
    $region23: #{tpu_custom_call.1} parent=1 // pred_check_branch
      %58 = sbr.rel (0) target = $region25
    $region24: #{tpu_custom_call.1} parent=1 // pred_region
      %60 = dma.done [#allocation6], 256
    $region25: #{tpu_custom_call.1} parent=1 // pred_fallthru
      _
    // Predicated region
    $region26: #{tpu_custom_call.1} parent=1 // pred_check
      _
    $region27: #{tpu_custom_call.1} parent=1 // pred_check_branch
      %62 = sbr.rel (0) target = $region29
    $region28: #{tpu_custom_call.1} parent=1 // pred_region
      %64 = dma.done [#allocation6], 64
    $region29: #{tpu_custom_call.1} parent=1 // pred_fallthru
      _
    %v66 = vld [vmem:[#allocation2] sm:$0xf]
    %v67 = vld [vmem:[#allocation5] sm:$0xf]
    %v68 = vld [vmem:[#allocation5 + $0x4] sm:$0xf]
    %v69 = vld [vmem:[#allocation5 + $0x8] sm:$0xf]
    %v70 = vld [vmem:[#allocation5 + $0xc] sm:$0xf]
    %v71 = vld [vmem:[%s2] sm:$0x1]
    %v73 = vperm.slane %v71, 0
    %v79 = vunpack.c.l.b16 %v67
    %v80 = vunpack.c.l.b16 %v68
    %v81 = vunpack.c.l.b16 %v69
    %v82 = vunpack.c.l.b16 %v70
    %v83 = vpack.c.b16 %v80, %v79
    %v84 = vpack.c.b16 %v82, %v81
    %vm87 = vcmask 261120
    %v89 = vsel %vm87, %v66, 0
    %91 = vmatpush.bf16.msra.mxu0 0
    %92 = vmatpush.bf16.msra.mxu0 0
    %93 = vmatpush.bf16.msra.mxu0 0
    %94 = vmatpush.bf16.msra.mxu0 0
    %95 = vmatpush.bf16.msra.mxu0 0
    %96 = vmatpush.bf16.msra.mxu0 0
    %97 = vmatpush.bf16.msra.mxu0 %v84
    %98 = vmatpush.bf16.msra.mxu0 %v83
    %99 = vmatmul.bf16.gmra.mxu0 %v89
    %v100 = vpop.f32.mrf.mxu0
    %v101 = vadd.f32 %v73, %v100
    %v102 = vpop.f32.mrf.mxu0
    %103 = vdwg.mxu0
    %v104 = vmax.f32 %v101, 0.0
    %v105 = vpack.c.bf16 %v104, %v104
    %v106 = vld [vmem:[#allocation7] sm:$0xf]
    %107 = vmatpush.bf16.xpose.msra.mxu0 0
    %108 = vmatpush.bf16.xpose.msra.mxu0 0
    %109 = vmatpush.bf16.xpose.msra.mxu0 0
    %110 = vmatpush.bf16.xpose.msra.mxu0 0
    %111 = vmatpush.bf16.xpose.msra.mxu0 0
    %112 = vmatpush.bf16.xpose.msra.mxu0 0
    %113 = vmatpush.bf16.xpose.msra.mxu0 0
    %114 = vmatpush.bf16.xpose.msra.mxu0 %v105
    %115 = vmatmul.bf16.gmra.mxu0 %v106
    %v116 = vpop.f32.mrf.mxu0
    %v117 = vadd.f32 0.0, %v116
    %v118 = vpop.f32.mrf.mxu0
    %119 = vdwg.mxu0
    %vm120 = vcmask 57344
    %121 = vst.msk [vmem:[#allocation8] sm:$0x1] %vm120, %v117
    %v122 = vsel %vm120, %v117, -inf
    %123 = vmax.xlane.f32.xlu0 %v122
    %v124 = vpop.xlane.xlu0 %123
    %v125 = vsub.f32 %v117, %v124
    %v126 = vmul.f32 %v125, 1.442695
    %v127 = vpow.pop %v126
    %v128 = vsel %vm120, %v127, 0.0
    %129 = vadd.xlane.f32.xlu0 %v128
    %v130 = vpop.xlane.xlu0 %129
    %131 = vst [vmem:[#allocation9] sm:$0x1] %v124
    %132 = vst [vmem:[#allocation11] sm:$0x1] %v130
    // Predicated region
    $region30: #{tpu_custom_call.1} parent=1 // pred_check
      _
    $region31: #{tpu_custom_call.1} parent=1 // pred_check_branch
      %134 = sbr.rel (0) target = $region33
    $region32: #{tpu_custom_call.1} parent=1 // pred_region
      %136 = vsyncadd [#allocation4], 0
      %s138 = sshll.u32 [#allocation8], 4
      %s139 = int_to_ptr.vmem [resolvable:$true] %s138
      %s140 = sshll.u32 %s4, 4
      %s141 = int_to_ptr.hbm [resolvable:$true] %s140
      %143 = dma.vmem_to_hbm [thread:$0]  %s139, 16, %s141, [#allocation4]
    $region33: #{tpu_custom_call.1} parent=1 // pred_fallthru
      _
    // Predicated region
    $region34: #{tpu_custom_call.1} parent=1 // pred_check
      _
    $region35: #{tpu_custom_call.1} parent=1 // pred_check_branch
      %145 = sbr.rel (0) target = $region37
    $region36: #{tpu_custom_call.1} parent=1 // pred_region
      %147 = vsyncadd [#allocation10], 0
      %s149 = sshll.u32 [#allocation9], 4
      %s150 = int_to_ptr.vmem [resolvable:$true] %s149
      %s151 = sshll.u32 %s5, 4
      %s152 = int_to_ptr.hbm [resolvable:$true] %s151
      %154 = dma.vmem_to_hbm [thread:$0]  %s150, 16, %s152, [#allocation10]
    $region37: #{tpu_custom_call.1} parent=1 // pred_fallthru
      _
    // Predicated region
    $region38: #{tpu_custom_call.1} parent=1 // pred_check
      _
    $region39: #{tpu_custom_call.1} parent=1 // pred_check_branch
      %156 = sbr.rel (0) target = $region41
    $region40: #{tpu_custom_call.1} parent=1 // pred_region
      %158 = vsyncadd [#allocation10], 0
      %s160 = sshll.u32 [#allocation11], 4
      %s161 = int_to_ptr.vmem [resolvable:$true] %s160
      %s162 = sshll.u32 %s6, 4
      %s163 = int_to_ptr.hbm [resolvable:$true] %s162
      %165 = dma.vmem_to_hbm [thread:$0]  %s161, 16, %s163, [#allocation10]
    $region41: #{tpu_custom_call.1} parent=1 // pred_fallthru
      _
    // Predicated region
    $region42: #{tpu_custom_call.1} parent=1 // pred_check
      _
    $region43: #{tpu_custom_call.1} parent=1 // pred_check_branch
      %167 = sbr.rel (0) target = $region45
    $region44: #{tpu_custom_call.1} parent=1 // pred_region
      %169 = dma.done [#allocation4], 16
    $region45: #{tpu_custom_call.1} parent=1 // pred_fallthru
      _
    // Predicated region
    $region46: #{tpu_custom_call.1} parent=1 // pred_check
      _
    $region47: #{tpu_custom_call.1} parent=1 // pred_check_branch
      %171 = sbr.rel (0) target = $region49
    $region48: #{tpu_custom_call.1} parent=1 // pred_region
      %173 = dma.done [#allocation10], 16
    $region49: #{tpu_custom_call.1} parent=1 // pred_fallthru
      _
    // Predicated region
    $region50: #{tpu_custom_call.1} parent=1 // pred_check
      _
    $region51: #{tpu_custom_call.1} parent=1 // pred_check_branch
      %175 = sbr.rel (0) target = $region53
    $region52: #{tpu_custom_call.1} parent=1 // pred_region
      %177 = dma.done [#allocation10], 16
    $region53: #{tpu_custom_call.1} parent=1 // pred_fallthru
      _
    %178 = vsyncpa [#allocation3], 1
    %179 = vsyncpa [#allocation6], 1
    %180 = vsyncpa [#allocation4], 1
    %181 = vsyncpa [#allocation10], 1

</llo_original>
